<compile_context>
chip_gen: v5e
topology: v5e:2x2
jax: 0.10.0
libtpu: 0.0.40
codegen_flags: <defaults>
</compile_context>

<pallas_src>
import math

import jax
import jax.numpy as jnp
from jax.experimental import pallas as pl
from jax.experimental.pallas import tpu as pltpu

HIDDEN = 256
TIME_DIM = 128


def _round_up(x: int, m: int) -> int:
    return (x + m - 1) // m * m


# ---------------------------------------------------------------------------
# In-kernel Mish: x * tanh(softplus(x)) == x * (u^2 - 1) / (u^2 + 1), u = 1+e^x
# One exp (EUP) + VPU mul/add + one reciprocal (EUP slot).  Clamp the exp arg:
# for x >= 30 tanh(softplus(x)) == 1 to f32 precision; clamp keeps u^2 finite.
# ---------------------------------------------------------------------------
def _mish(x):
    e = jnp.exp(jnp.minimum(x, 30.0))
    u = 1.0 + e
    n = u * u
    return x * (n - 1.0) * pl.reciprocal(n + 1.0, approx=False)


# ---------------------------------------------------------------------------
# Pallas kernel: 3-layer MLP (eps_net hot path), bf16 MXU / f32 elementwise.
# x_ref arrives already bf16; b1 is folded into w1 via the ones column in x.
# ---------------------------------------------------------------------------
def eps_net_kernel(x_ref, w1_ref, w2_ref, b2_ref, w3_ref, b3_ref, out_ref):
    h = jnp.dot(x_ref[...], w1_ref[...], preferred_element_type=jnp.float32)
    h = _mish(h)
    h = jnp.dot(h.astype(jnp.bfloat16), w2_ref[...],
                preferred_element_type=jnp.float32) + b2_ref[...]
    h = _mish(h)
    out_ref[...] = (
        jnp.dot(h.astype(jnp.bfloat16), w3_ref[...],
                preferred_element_type=jnp.float32) + b3_ref[...]
    )


# ---------------------------------------------------------------------------
# Sinusoidal timestep embedding (guided-diffusion `timestep_embedding`:
# [cos, sin] ordering, matching the helper name used by the reference module).
# NOTE: Diffusion-QL's SinusoidalPosEmb uses [sin, cos]; verify ordering against
# the actual checkpoint before loading trained weights.
# ---------------------------------------------------------------------------
def timestep_embedding(t, dim=TIME_DIM, max_period=10000.0):
    half = dim // 2
    freqs = jnp.exp(
        -math.log(max_period) * jnp.arange(half, dtype=jnp.float32) / float(half)
    )
    args = t.astype(jnp.float32)[:, None] * freqs[None, :]
    return jnp.concatenate([jnp.cos(args), jnp.sin(args)], axis=-1)


# ---------------------------------------------------------------------------
# Parameter init (raw f32, PyTorch-Linear-style +/- 1/sqrt(fan_in)) and the
# one-time padding / bf16 cast / embedding-table build used by the kernel.
# ---------------------------------------------------------------------------
def init_params(key, state_dim, action_dim):
    in_dim = state_dim + action_dim + TIME_DIM
    dims = [(in_dim, HIDDEN), (HIDDEN, HIDDEN), (HIDDEN, action_dim)]
    raw = {}
    for i, (fi, fo) in enumerate(dims, start=1):
        key, kw, kb = jax.random.split(key, 3)
        bound = 1.0 / math.sqrt(fi)
        raw[f"w{i}"] = jax.random.uniform(kw, (fi, fo), jnp.float32, -bound, bound)
        raw[f"b{i}"] = jax.random.uniform(kb, (fo,), jnp.float32, -bound, bound)
    return raw


def prepare_params(raw, state_dim, action_dim, n_diffusion_steps):
    """Done once, not per call: pad to MXU/lane-friendly shapes, cast weights to
    bf16, and precompute the (N+1, 128) timestep-embedding table."""
    din = state_dim + action_dim + TIME_DIM
    pad_in = max(256, _round_up(din + 1, 128))      # +1 for the bias ones-column
    pad_out = max(128, _round_up(action_dim, 128))  # lane-dense output

    w1 = jnp.zeros((pad_in, HIDDEN), jnp.float32)
    w1 = w1.at[:din, :].set(raw["w1"])
    w1 = w1.at[din, :].set(raw["b1"])               # bias row hit by ones-column

    w3 = jnp.zeros((HIDDEN, pad_out), jnp.float32).at[:, :action_dim].set(raw["w3"])
    b3 = jnp.zeros((pad_out,), jnp.float32).at[:action_dim].set(raw["b3"])

    # Rows indexed directly by t in [0, N]; row 0 unused by forward() (t >= 1).
    emb_table = timestep_embedding(
        jnp.arange(n_diffusion_steps + 1, dtype=jnp.float32), TIME_DIM
    )

    return {
        "w1": w1.astype(jnp.bfloat16),
        "w2": raw["w2"].astype(jnp.bfloat16),
        "b2": raw["b2"].reshape(1, HIDDEN).astype(jnp.float32),
        "w3": w3.astype(jnp.bfloat16),
        "b3": b3.reshape(1, pad_out).astype(jnp.float32),
        "emb_table": emb_table,                      # (N+1, 128) f32
        "state_dim": state_dim,
        "action_dim": action_dim,
    }


def _choose_tile(batch: int, block_b: int) -> int:
    """Batch tile: multiple of 16 (bf16 sublane tile), capped at block_b, and for
    large batches small enough that the grid has >= 2 tiles (v7x megacore)."""
    half = _round_up(max(-(-batch // 2), 1), 16)
    return max(16, min(block_b, half))


# ---------------------------------------------------------------------------
# Forward wrapper (== EfficientDiffusionPolicy.forward)
# ---------------------------------------------------------------------------
def efficient_diffusion_policy_forward(prep, a_t, s, t, *, block_b=1024):
    a_dim = a_t.shape[-1]
    din = a_t.shape[-1] + s.shape[-1] + TIME_DIM
    pad_in = prep["w1"].shape[0]
    pad_out = prep["w3"].shape[1]
    assert din + 1 <= pad_in

    B = a_t.shape[0]
    tb = _choose_tile(B, block_b)
    b_pad = _round_up(B, tb)
    grid = (b_pad // tb,)

    # Timestep embedding = single gather from the precomputed table.
    emb = jnp.take(prep["emb_table"], t, axis=0)

    # One concat (with the bias ones-column) + one pad, cast once to bf16.
    ones = jnp.ones((B, 1), jnp.float32)
    x = jnp.concatenate([a_t, s, emb, ones], axis=-1).astype(jnp.bfloat16)
    x_pad = jnp.pad(x, ((0, b_pad - B), (0, pad_in - (din + 1))))

    flops = 2 * b_pad * (pad_in * HIDDEN + HIDDEN * HIDDEN + HIDDEN * pad_out)
    bytes_accessed = (
        b_pad * pad_in * 2 + b_pad * pad_out * 4          # x (bf16) + out (f32)
        + pad_in * HIDDEN * 2 + HIDDEN * HIDDEN * 2       # w1, w2 (bf16)
        + HIDDEN * pad_out * 2 + HIDDEN * 4 + pad_out * 4  # w3 (bf16), b2, b3 (f32)
    )
    cost = pl.CostEstimate(
        flops=flops,
        transcendentals=2 * b_pad * HIDDEN,               # two Mish exp layers
        bytes_accessed=bytes_accessed,
    )

    out = pl.pallas_call(
        eps_net_kernel,
        out_shape=jax.ShapeDtypeStruct((b_pad, pad_out), jnp.float32),
        grid=grid,
        in_specs=[
            pl.BlockSpec((tb, pad_in), lambda i: (i, 0)),       # batch tile of x (bf16)
            pl.BlockSpec((pad_in, HIDDEN), lambda i: (0, 0)),   # w1(+b1) VMEM-resident
            pl.BlockSpec((HIDDEN, HIDDEN), lambda i: (0, 0)),   # w2 VMEM-resident
            pl.BlockSpec((1, HIDDEN), lambda i: (0, 0)),        # b2
            pl.BlockSpec((HIDDEN, pad_out), lambda i: (0, 0)),  # w3 VMEM-resident
            pl.BlockSpec((1, pad_out), lambda i: (0, 0)),       # b3
        ],
        out_specs=pl.BlockSpec((tb, pad_out), lambda i: (i, 0)),
        compiler_params=pltpu.CompilerParams(
            dimension_semantics=("parallel",),   # batch tiles shard across v7x TCs
            vmem_limit_bytes=32 * 1024 * 1024,   # insurance for large tiles on v5e
        ),
        cost_estimate=cost,
    )(x_pad, prep["w1"], prep["w2"], prep["b2"], prep["w3"], prep["b3"])

    # Padded rows/lanes carry garbage (mish(b2)·w3 + b3); always slice before use.
    return out[:B, :a_dim]


# ---------------------------------------------------------------------------
# Pure-JAX f32 reference (original module semantics) for a sanity check.
# ---------------------------------------------------------------------------
def _mish_ref(x):
    return x * jnp.tanh(jnp.logaddexp(x, 0.0))


def _reference_forward(raw, a_t, s, t):
    emb = timestep_embedding(t, TIME_DIM)
    x = jnp.concatenate([a_t, s, emb], axis=-1).astype(jnp.float32)
    h = _mish_ref(x @ raw["w1"] + raw["b1"])
    h = _mish_ref(h @ raw["w2"] + raw["b2"])
    return h @ raw["w3"] + raw["b3"]


if __name__ == "__main__":
    B, STATE_DIM, ACTION_DIM = 2, 16, 8
    N_DIFFUSION_STEPS = 100

    key = jax.random.PRNGKey(0)
    kp, ka, ks, kt = jax.random.split(key, 4)

    raw = init_params(kp, STATE_DIM, ACTION_DIM)
    prep = prepare_params(raw, STATE_DIM, ACTION_DIM, N_DIFFUSION_STEPS)

    a_t = jax.random.normal(ka, (B, ACTION_DIM), jnp.float32)   # noised action a_t
    s = jax.random.normal(ks, (B, STATE_DIM), jnp.float32)      # state
    t = jax.random.randint(kt, (B,), 1, N_DIFFUSION_STEPS + 1)  # diffusion step

    fwd = jax.jit(efficient_diffusion_policy_forward)
    eps_pred = jax.block_until_ready(fwd(prep, a_t, s, t))

    eps_ref = _reference_forward(raw, a_t, s, t)
    assert eps_pred.shape == (B, ACTION_DIM)
    # bf16 MXU path vs f32 reference -> loosened tolerance.
    assert jnp.allclose(eps_pred, eps_ref, atol=5e-2, rtol=5e-2), float(
        jnp.max(jnp.abs(eps_pred - eps_ref))
    )

    # Quick batched smoke test (exercises multi-tile grid / parallel axis).
    B2 = 512
    kb1, kb2, kb3 = jax.random.split(jax.random.PRNGKey(1), 3)
    a2 = jax.random.normal(kb1, (B2, ACTION_DIM), jnp.float32)
    s2 = jax.random.normal(kb2, (B2, STATE_DIM), jnp.float32)
    t2 = jax.random.randint(kb3, (B2,), 1, N_DIFFUSION_STEPS + 1)
    out2 = jax.block_until_ready(fwd(prep, a2, s2, t2))
    ref2 = _reference_forward(raw, a2, s2, t2)
    assert out2.shape == (B2, ACTION_DIM)
    assert jnp.allclose(out2, ref2, atol=5e-2, rtol=5e-2), float(
        jnp.max(jnp.abs(out2 - ref2))
    )

    print("KERNEL_OK")
</pallas_src>

<mosaic_0001>
module attributes {stable_mosaic.version = 11 : i64} {
  func.func @eps_net_kernel(%arg0: i32, %arg1: memref<16x256xbf16, #tpu.memory_space<vmem>>, %arg2: memref<256x256xbf16, #tpu.memory_space<vmem>>, %arg3: memref<256x256xbf16, #tpu.memory_space<vmem>>, %arg4: memref<1x256xf32, #tpu.memory_space<vmem>>, %arg5: memref<256x128xbf16, #tpu.memory_space<vmem>>, %arg6: memref<1x128xf32, #tpu.memory_space<vmem>>, %arg7: memref<16x128xf32, #tpu.memory_space<vmem>>) attributes {dimension_semantics = [#tpu.dimension_semantics<parallel>], iteration_bounds = array<i64: 1>, scalar_prefetch = 0 : i64, scratch_operands = 0 : i64, tpu.core_type = #tpu.core_type<tc>, window_params = [{transform_indices = @transform_0, window_bounds = array<i64: 16, 256>}, {pipeline_mode = #tpu.pipeline_mode<synchronous>, transform_indices = @transform_1, window_bounds = array<i64: 256, 256>}, {pipeline_mode = #tpu.pipeline_mode<synchronous>, transform_indices = @transform_2, window_bounds = array<i64: 256, 256>}, {pipeline_mode = #tpu.pipeline_mode<synchronous>, transform_indices = @transform_3, window_bounds = array<i64: 1, 256>}, {pipeline_mode = #tpu.pipeline_mode<synchronous>, transform_indices = @transform_4, window_bounds = array<i64: 256, 128>}, {pipeline_mode = #tpu.pipeline_mode<synchronous>, transform_indices = @transform_5, window_bounds = array<i64: 1, 128>}, {transform_indices = @transform_6, window_bounds = array<i64: 16, 128>}]} {
    %c0 = arith.constant 0 : index
    %c0_0 = arith.constant 0 : index
    %0 = vector.load %arg1[%c0, %c0_0] : memref<16x256xbf16, #tpu.memory_space<vmem>>, vector<16x256xbf16>
    %c0_1 = arith.constant 0 : index
    %c0_2 = arith.constant 0 : index
    %1 = vector.load %arg2[%c0_1, %c0_2] : memref<256x256xbf16, #tpu.memory_space<vmem>>, vector<256x256xbf16>
    %cst = arith.constant dense<0.000000e+00> : vector<16x256xf32>
    %2 = tpu.matmul %0, %1, %cst {dimension_numbers = #tpu.dot_dimension_numbers<[1], [0], [0], [1], [0, 0, 1, 1], [], []>} : vector<16x256xbf16>, vector<256x256xbf16>, vector<16x256xf32> -> vector<16x256xf32>
    %cst_3 = arith.constant 3.000000e+01 : f32
    %3 = vector.broadcast %cst_3 : f32 to vector<16x256xf32>
    %4 = arith.minimumf %2, %3 : vector<16x256xf32>
    %5 = math.exp %4 : vector<16x256xf32>
    %cst_4 = arith.constant 1.000000e+00 : f32
    %6 = vector.broadcast %cst_4 : f32 to vector<16x256xf32>
    %7 = arith.addf %6, %5 : vector<16x256xf32>
    %8 = arith.mulf %7, %7 : vector<16x256xf32>
    %cst_5 = arith.constant 1.000000e+00 : f32
    %9 = vector.broadcast %cst_5 : f32 to vector<16x256xf32>
    %10 = arith.subf %8, %9 : vector<16x256xf32>
    %11 = arith.mulf %2, %10 : vector<16x256xf32>
    %cst_6 = arith.constant 1.000000e+00 : f32
    %12 = vector.broadcast %cst_6 : f32 to vector<16x256xf32>
    %13 = arith.addf %8, %12 : vector<16x256xf32>
    %14 = tpu.reciprocal %13 : vector<16x256xf32> -> vector<16x256xf32>
    %15 = arith.mulf %11, %14 : vector<16x256xf32>
    %16 = arith.truncf %15 : vector<16x256xf32> to vector<16x256xbf16>
    %c0_7 = arith.constant 0 : index
    %c0_8 = arith.constant 0 : index
    %17 = vector.load %arg3[%c0_7, %c0_8] : memref<256x256xbf16, #tpu.memory_space<vmem>>, vector<256x256xbf16>
    %cst_9 = arith.constant dense<0.000000e+00> : vector<16x256xf32>
    %18 = tpu.matmul %16, %17, %cst_9 {dimension_numbers = #tpu.dot_dimension_numbers<[1], [0], [0], [1], [0, 0, 1, 1], [], []>} : vector<16x256xbf16>, vector<256x256xbf16>, vector<16x256xf32> -> vector<16x256xf32>
    %c0_10 = arith.constant 0 : index
    %c0_11 = arith.constant 0 : index
    %19 = vector.load %arg4[%c0_10, %c0_11] : memref<1x256xf32, #tpu.memory_space<vmem>>, vector<1x256xf32>
    %20 = vector.broadcast %19 : vector<1x256xf32> to vector<16x256xf32>
    %21 = arith.addf %18, %20 : vector<16x256xf32>
    %cst_12 = arith.constant 3.000000e+01 : f32
    %22 = vector.broadcast %cst_12 : f32 to vector<16x256xf32>
    %23 = arith.minimumf %21, %22 : vector<16x256xf32>
    %24 = math.exp %23 : vector<16x256xf32>
    %cst_13 = arith.constant 1.000000e+00 : f32
    %25 = vector.broadcast %cst_13 : f32 to vector<16x256xf32>
    %26 = arith.addf %25, %24 : vector<16x256xf32>
    %27 = arith.mulf %26, %26 : vector<16x256xf32>
    %cst_14 = arith.constant 1.000000e+00 : f32
    %28 = vector.broadcast %cst_14 : f32 to vector<16x256xf32>
    %29 = arith.subf %27, %28 : vector<16x256xf32>
    %30 = arith.mulf %21, %29 : vector<16x256xf32>
    %cst_15 = arith.constant 1.000000e+00 : f32
    %31 = vector.broadcast %cst_15 : f32 to vector<16x256xf32>
    %32 = arith.addf %27, %31 : vector<16x256xf32>
    %33 = tpu.reciprocal %32 : vector<16x256xf32> -> vector<16x256xf32>
    %34 = arith.mulf %30, %33 : vector<16x256xf32>
    %35 = arith.truncf %34 : vector<16x256xf32> to vector<16x256xbf16>
    %c0_16 = arith.constant 0 : index
    %c0_17 = arith.constant 0 : index
    %36 = vector.load %arg5[%c0_16, %c0_17] : memref<256x128xbf16, #tpu.memory_space<vmem>>, vector<256x128xbf16>
    %cst_18 = arith.constant dense<0.000000e+00> : vector<16x128xf32>
    %37 = tpu.matmul %35, %36, %cst_18 {dimension_numbers = #tpu.dot_dimension_numbers<[1], [0], [0], [1], [0, 0, 1, 1], [], []>} : vector<16x256xbf16>, vector<256x128xbf16>, vector<16x128xf32> -> vector<16x128xf32>
    %c0_19 = arith.constant 0 : index
    %c0_20 = arith.constant 0 : index
    %38 = vector.load %arg6[%c0_19, %c0_20] : memref<1x128xf32, #tpu.memory_space<vmem>>, vector<1x128xf32>
    %39 = vector.broadcast %38 : vector<1x128xf32> to vector<16x128xf32>
    %40 = arith.addf %37, %39 : vector<16x128xf32>
    %c0_21 = arith.constant 0 : index
    %c0_22 = arith.constant 0 : index
    %41 = vector.load %arg7[%c0_21, %c0_22] : memref<16x128xf32, #tpu.memory_space<vmem>>, vector<16x128xf32>
    tpu.vector_store %arg7[%c0_21, %c0_22], %40 {strides = array<i32>} : memref<16x128xf32, #tpu.memory_space<vmem>>, vector<16x128xf32>,
    return
  }
  func.func @transform_0(%arg0: i32) -> (i32, i32) {
    %c0_i32 = arith.constant 0 : i32
    %c0_i32_0 = arith.constant 0 : i32
    return %arg0, %c0_i32 : i32, i32
  }
  func.func @transform_1(%arg0: i32) -> (i32, i32) {
    %c0_i32 = arith.constant 0 : i32
    %c0_i32_0 = arith.constant 0 : i32
    %c0_i32_1 = arith.constant 0 : i32
    return %c0_i32, %c0_i32_0 : i32, i32
  }
  func.func @transform_2(%arg0: i32) -> (i32, i32) {
    %c0_i32 = arith.constant 0 : i32
    %c0_i32_0 = arith.constant 0 : i32
    %c0_i32_1 = arith.constant 0 : i32
    return %c0_i32, %c0_i32_0 : i32, i32
  }
  func.func @transform_3(%arg0: i32) -> (i32, i32) {
    %c0_i32 = arith.constant 0 : i32
    %c0_i32_0 = arith.constant 0 : i32
    %c0_i32_1 = arith.constant 0 : i32
    return %c0_i32, %c0_i32_0 : i32, i32
  }
  func.func @transform_4(%arg0: i32) -> (i32, i32) {
    %c0_i32 = arith.constant 0 : i32
    %c0_i32_0 = arith.constant 0 : i32
    %c0_i32_1 = arith.constant 0 : i32
    return %c0_i32, %c0_i32_0 : i32, i32
  }
  func.func @transform_5(%arg0: i32) -> (i32, i32) {
    %c0_i32 = arith.constant 0 : i32
    %c0_i32_0 = arith.constant 0 : i32
    %c0_i32_1 = arith.constant 0 : i32
    return %c0_i32, %c0_i32_0 : i32, i32
  }
  func.func @transform_6(%arg0: i32) -> (i32, i32) {
    %c0_i32 = arith.constant 0 : i32
    %c0_i32_0 = arith.constant 0 : i32
    return %arg0, %c0_i32 : i32, i32
  }
}

</mosaic_0001>

<llo_original>
// kernel: efficient_diffusion_policy_forward.1
$region0: #{efficient_diffusion_policy_forward.1}
  #allocation0 [shape = 'u32[]', space=smem, size = 0x4, offset = 0x4, fixed_abs, tag = 'smem constant byte address 0x4 - core index']
  #allocation1 [shape = 'u32[72,128]{1,0:T(1,128)}', space=vmem, size = 0x9000, scoped, tag = 'internal scratch']
  %s0 = inlined_call_operand.vmem [shape: bf16[16,256], index: 0, kind: input, shape index: {}]
  %s1 = inlined_call_operand.hbm [shape: bf16[256,256], index: 1, kind: input, shape index: {}]
  %s2 = inlined_call_operand.hbm [shape: bf16[256,256], index: 2, kind: input, shape index: {}]
  %s3 = inlined_call_operand.vmem [shape: f32[1,256], index: 3, kind: input, shape index: {}]
  %s4 = inlined_call_operand.hbm [shape: bf16[256,128], index: 4, kind: input, shape index: {}]
  %s5 = inlined_call_operand.vmem [shape: f32[1,128], index: 5, kind: input, shape index: {}]
  %s6 = inlined_call_operand.vmem [shape: f32[16,128], index: 6, kind: output, shape index: {}]
  %s7 = sld [smem:[#allocation0]]
  $region46: #{efficient_diffusion_policy_forward.1} parent=0
    _
  %s9 = ssub.s32 1, %s7
  %s10 = scalar_select 0, %s9, %s7
  $region1: #{efficient_diffusion_policy_forward.1} parent=0
    #allocation2 [shape = 'u8[131072]{0}', space=vmem, size = 0x20000, scoped, tag = 'input window, operand 1, single buffered']
    #allocation3 [shape = 's32[1]{0}', space=sflag, size = 0x4, scoped, tag = 'scoped memory for efficient_diffusion_policy_forward.1']
    #allocation4 [shape = 'u8[131072]{0}', space=vmem, size = 0x20000, scoped, tag = 'input window, operand 2, single buffered']
    #allocation5 [shape = 's32[1]{0}', space=sflag, size = 0x4, scoped, tag = 'scoped memory for efficient_diffusion_policy_forward.1']
    #allocation6 [shape = 'u8[65536]{0}', space=vmem, size = 0x10000, scoped, tag = 'input window, operand 4, single buffered']
    %11 = vsyncpa [#allocation3], 0
    %12 = vsyncpa [#allocation5], 0
    // Predicated region
    $region2: #{efficient_diffusion_policy_forward.1} parent=1 // pred_check
      _
    $region3: #{efficient_diffusion_policy_forward.1} parent=1 // pred_check_branch
      %14 = sbr.rel (0) target = $region5
    $region4: #{efficient_diffusion_policy_forward.1} parent=1 // pred_region
      _
    $region5: #{efficient_diffusion_policy_forward.1} parent=1 // pred_fallthru
      _
    // Predicated region
    $region6: #{efficient_diffusion_policy_forward.1} parent=1 // pred_check
      _
    $region7: #{efficient_diffusion_policy_forward.1} parent=1 // pred_check_branch
      %16 = sbr.rel (0) target = $region9
    $region8: #{efficient_diffusion_policy_forward.1} parent=1 // pred_region
      %18 = vsyncadd [#allocation3], 0
      %s19 = sshll.u32 %s1, 4
      %s20 = int_to_ptr.hbm [resolvable:$true] %s19
      %s21 = sshll.u32 [#allocation2], 4
      %s22 = int_to_ptr.vmem [resolvable:$true] %s21
      %27 = dma.hbm_to_vmem [thread:$0]  %s20, 4096, %s22, [#allocation3], 128, 128, 8
    $region9: #{efficient_diffusion_policy_forward.1} parent=1 // pred_fallthru
      _
    // Predicated region
    $region10: #{efficient_diffusion_policy_forward.1} parent=1 // pred_check
      _
    $region11: #{efficient_diffusion_policy_forward.1} parent=1 // pred_check_branch
      %29 = sbr.rel (0) target = $region13
    $region12: #{efficient_diffusion_policy_forward.1} parent=1 // pred_region
      %31 = vsyncadd [#allocation5], 0
      %s32 = sshll.u32 %s2, 4
      %s33 = int_to_ptr.hbm [resolvable:$true] %s32
      %s34 = sshll.u32 [#allocation4], 4
      %s35 = int_to_ptr.vmem [resolvable:$true] %s34
      %40 = dma.hbm_to_vmem [thread:$0]  %s33, 4096, %s35, [#allocation5], 128, 128, 8
    $region13: #{efficient_diffusion_policy_forward.1} parent=1 // pred_fallthru
      _
    // Predicated region
    $region14: #{efficient_diffusion_policy_forward.1} parent=1 // pred_check
      _
    $region15: #{efficient_diffusion_policy_forward.1} parent=1 // pred_check_branch
      %42 = sbr.rel (0) target = $region17
    $region16: #{efficient_diffusion_policy_forward.1} parent=1 // pred_region
      _
    $region17: #{efficient_diffusion_policy_forward.1} parent=1 // pred_fallthru
      _
    // Predicated region
    $region18: #{efficient_diffusion_policy_forward.1} parent=1 // pred_check
      _
    $region19: #{efficient_diffusion_policy_forward.1} parent=1 // pred_check_branch
      %44 = sbr.rel (0) target = $region21
    $region20: #{efficient_diffusion_policy_forward.1} parent=1 // pred_region
      %46 = vsyncadd [#allocation5], 0
      %s47 = sshll.u32 %s4, 4
      %s48 = int_to_ptr.hbm [resolvable:$true] %s47
      %s49 = sshll.u32 [#allocation6], 4
      %s50 = int_to_ptr.vmem [resolvable:$true] %s49
      %55 = dma.hbm_to_vmem [thread:$0]  %s48, 2048, %s50, [#allocation5], 64, 64, 4
    $region21: #{efficient_diffusion_policy_forward.1} parent=1 // pred_fallthru
      _
    // Predicated region
    $region22: #{efficient_diffusion_policy_forward.1} parent=1 // pred_check
      _
    $region23: #{efficient_diffusion_policy_forward.1} parent=1 // pred_check_branch
      %57 = sbr.rel (0) target = $region25
    $region24: #{efficient_diffusion_policy_forward.1} parent=1 // pred_region
      _
    $region25: #{efficient_diffusion_policy_forward.1} parent=1 // pred_fallthru
      _
    // Predicated region
    $region26: #{efficient_diffusion_policy_forward.1} parent=1 // pred_check
      _
    $region27: #{efficient_diffusion_policy_forward.1} parent=1 // pred_check_branch
      %59 = sbr.rel (0) target = $region29
    $region28: #{efficient_diffusion_policy_forward.1} parent=1 // pred_region
      %61 = dma.done [#allocation3], 4096
    $region29: #{efficient_diffusion_policy_forward.1} parent=1 // pred_fallthru
      _
    // Predicated region
    $region30: #{efficient_diffusion_policy_forward.1} parent=1 // pred_check
      _
    $region31: #{efficient_diffusion_policy_forward.1} parent=1 // pred_check_branch
      %63 = sbr.rel (0) target = $region33
    $region32: #{efficient_diffusion_policy_forward.1} parent=1 // pred_region
      %65 = dma.done [#allocation5], 4096
    $region33: #{efficient_diffusion_policy_forward.1} parent=1 // pred_fallthru
      _
    // Predicated region
    $region34: #{efficient_diffusion_policy_forward.1} parent=1 // pred_check
      _
    $region35: #{efficient_diffusion_policy_forward.1} parent=1 // pred_check_branch
      %67 = sbr.rel (0) target = $region37
    $region36: #{efficient_diffusion_policy_forward.1} parent=1 // pred_region
      %69 = dma.done [#allocation5], 2048
    $region37: #{efficient_diffusion_policy_forward.1} parent=1 // pred_fallthru
      _
    %v70 = vld [vmem:[%s0] sm:$0xff]
    %v71 = vld [vmem:[%s0 + $0x8] sm:$0xff]
    %v72 = vld [vmem:[#allocation2] sm:$0xff]
    %v73 = vld [vmem:[#allocation2 + $0x8] sm:$0xff]
    %v74 = vld [vmem:[#allocation2 + $0x10] sm:$0xff]
    %v75 = vld [vmem:[#allocation2 + $0x18] sm:$0xff]
    %v76 = vld [vmem:[#allocation2 + $0x20] sm:$0xff]
    %v77 = vld [vmem:[#allocation2 + $0x28] sm:$0xff]
    %v78 = vld [vmem:[#allocation2 + $0x30] sm:$0xff]
    %v79 = vld [vmem:[#allocation2 + $0x38] sm:$0xff]
    %v80 = vld [vmem:[#allocation2 + $0x40] sm:$0xff]
    %v81 = vld [vmem:[#allocation2 + $0x48] sm:$0xff]
    %v82 = vld [vmem:[#allocation2 + $0x50] sm:$0xff]
    %v83 = vld [vmem:[#allocation2 + $0x58] sm:$0xff]
    %v84 = vld [vmem:[#allocation2 + $0x60] sm:$0xff]
    %v85 = vld [vmem:[#allocation2 + $0x68] sm:$0xff]
    %v86 = vld [vmem:[#allocation2 + $0x70] sm:$0xff]
    %v87 = vld [vmem:[#allocation2 + $0x78] sm:$0xff]
    %v88 = vld [vmem:[#allocation2 + $0x80] sm:$0xff]
    %v89 = vld [vmem:[#allocation2 + $0x88] sm:$0xff]
    %v90 = vld [vmem:[#allocation2 + $0x90] sm:$0xff]
    %v91 = vld [vmem:[#allocation2 + $0x98] sm:$0xff]
    %v92 = vld [vmem:[#allocation2 + $0xa0] sm:$0xff]
    %v93 = vld [vmem:[#allocation2 + $0xa8] sm:$0xff]
    %v94 = vld [vmem:[#allocation2 + $0xb0] sm:$0xff]
    %v95 = vld [vmem:[#allocation2 + $0xb8] sm:$0xff]
    %v96 = vld [vmem:[#allocation2 + $0xc0] sm:$0xff]
    %v97 = vld [vmem:[#allocation2 + $0xc8] sm:$0xff]
    %v98 = vld [vmem:[#allocation2 + $0xd0] sm:$0xff]
    %v99 = vld [vmem:[#allocation2 + $0xd8] sm:$0xff]
    %v100 = vld [vmem:[#allocation2 + $0xe0] sm:$0xff]
    %v101 = vld [vmem:[#allocation2 + $0xe8] sm:$0xff]
    %v102 = vld [vmem:[#allocation2 + $0xf0] sm:$0xff]
    %v103 = vld [vmem:[#allocation2 + $0xf8] sm:$0xff]
    %v106 = vunpack.c.l.b16 %v70
    %v107 = vunpack.c.h.b16 %v70
    %v108 = vunpack.c.l.b16 %v71
    %v109 = vunpack.c.h.b16 %v71
    %v110 = vpack.c.b16 %v108, %v106
    %v111 = vpack.c.b16 %v109, %v107
    %v146 = vunpack.c.l.b16 %v72
    %v147 = vunpack.c.h.b16 %v72
    %v148 = vunpack.c.l.b16 %v73
    %v149 = vunpack.c.h.b16 %v73
    %v150 = vunpack.c.l.b16 %v74
    %v151 = vunpack.c.h.b16 %v74
    %v152 = vunpack.c.l.b16 %v75
    %v153 = vunpack.c.h.b16 %v75
    %v154 = vunpack.c.l.b16 %v76
    %v155 = vunpack.c.h.b16 %v76
    %v156 = vunpack.c.l.b16 %v77
    %v157 = vunpack.c.h.b16 %v77
    %v158 = vunpack.c.l.b16 %v78
    %v159 = vunpack.c.h.b16 %v78
    %v160 = vunpack.c.l.b16 %v79
    %v161 = vunpack.c.h.b16 %v79
    %v162 = vunpack.c.l.b16 %v80
    %v163 = vunpack.c.h.b16 %v80
    %v164 = vunpack.c.l.b16 %v81
    %v165 = vunpack.c.h.b16 %v81
    %v166 = vunpack.c.l.b16 %v82
    %v167 = vunpack.c.h.b16 %v82
    %v168 = vunpack.c.l.b16 %v83
    %v169 = vunpack.c.h.b16 %v83
    %v170 = vunpack.c.l.b16 %v84
    %v171 = vunpack.c.h.b16 %v84
    %v172 = vunpack.c.l.b16 %v85
    %v173 = vunpack.c.h.b16 %v85
    %v174 = vunpack.c.l.b16 %v86
    %v175 = vunpack.c.h.b16 %v86
    %v176 = vunpack.c.l.b16 %v87
    %v177 = vunpack.c.h.b16 %v87
    %v178 = vunpack.c.l.b16 %v88
    %v179 = vunpack.c.h.b16 %v88
    %v180 = vunpack.c.l.b16 %v89
    %v181 = vunpack.c.h.b16 %v89
    %v182 = vunpack.c.l.b16 %v90
    %v183 = vunpack.c.h.b16 %v90
    %v184 = vunpack.c.l.b16 %v91
    %v185 = vunpack.c.h.b16 %v91
    %v186 = vunpack.c.l.b16 %v92
    %v187 = vunpack.c.h.b16 %v92
    %v188 = vunpack.c.l.b16 %v93
    %v189 = vunpack.c.h.b16 %v93
    %v190 = vunpack.c.l.b16 %v94
    %v191 = vunpack.c.h.b16 %v94
    %v192 = vunpack.c.l.b16 %v95
    %v193 = vunpack.c.h.b16 %v95
    %v194 = vunpack.c.l.b16 %v96
    %v195 = vunpack.c.h.b16 %v96
    %v196 = vunpack.c.l.b16 %v97
    %v197 = vunpack.c.h.b16 %v97
    %v198 = vunpack.c.l.b16 %v98
    %v199 = vunpack.c.h.b16 %v98
    %v200 = vunpack.c.l.b16 %v99
    %v201 = vunpack.c.h.b16 %v99
    %v202 = vunpack.c.l.b16 %v100
    %v203 = vunpack.c.h.b16 %v100
    %v204 = vunpack.c.l.b16 %v101
    %v205 = vunpack.c.h.b16 %v101
    %v206 = vunpack.c.l.b16 %v102
    %v207 = vunpack.c.h.b16 %v102
    %v208 = vunpack.c.l.b16 %v103
    %v209 = vunpack.c.h.b16 %v103
    %v210 = vpack.c.b16 %v148, %v146
    %v211 = vpack.c.b16 %v149, %v147
    %v212 = vpack.c.b16 %v152, %v150
    %v213 = vpack.c.b16 %v153, %v151
    %v214 = vpack.c.b16 %v156, %v154
    %v215 = vpack.c.b16 %v157, %v155
    %v216 = vpack.c.b16 %v160, %v158
    %v217 = vpack.c.b16 %v161, %v159
    %v218 = vpack.c.b16 %v164, %v162
    %v219 = vpack.c.b16 %v165, %v163
    %v220 = vpack.c.b16 %v168, %v166
    %v221 = vpack.c.b16 %v169, %v167
    %v222 = vpack.c.b16 %v172, %v170
    %v223 = vpack.c.b16 %v173, %v171
    %v224 = vpack.c.b16 %v176, %v174
    %v225 = vpack.c.b16 %v177, %v175
    %v226 = vpack.c.b16 %v180, %v178
    %v227 = vpack.c.b16 %v181, %v179
    %v228 = vpack.c.b16 %v184, %v182
    %v229 = vpack.c.b16 %v185, %v183
    %v230 = vpack.c.b16 %v188, %v186
    %v231 = vpack.c.b16 %v189, %v187
    %v232 = vpack.c.b16 %v192, %v190
    %v233 = vpack.c.b16 %v193, %v191
    %v234 = vpack.c.b16 %v196, %v194
    %v235 = vpack.c.b16 %v197, %v195
    %v236 = vpack.c.b16 %v200, %v198
    %v237 = vpack.c.b16 %v201, %v199
    %v238 = vpack.c.b16 %v204, %v202
    %v239 = vpack.c.b16 %v205, %v203
    %v240 = vpack.c.b16 %v208, %v206
    %v241 = vpack.c.b16 %v209, %v207
    %274 = vmatpush.bf16.msra.mxu0 %v224
    %275 = vmatpush.bf16.msra.mxu0 %v222
    %276 = vmatpush.bf16.msra.mxu0 %v220
    %277 = vmatpush.bf16.msra.mxu0 %v218
    %278 = vmatpush.bf16.msra.mxu0 %v216
    %279 = vmatpush.bf16.msra.mxu0 %v214
    %280 = vmatpush.bf16.msra.mxu0 %v212
    %281 = vmatpush.bf16.msra.mxu0 %v210
    %282 = vmatmul.bf16.gmra.mxu0 %v110
    %v283 = vpop.f32.mrf.mxu0
    %v284 = vadd.f32 0.0, %v283
    %v285 = vpop.f32.mrf.mxu0
    %v286 = vadd.f32 0.0, %v285
    %287 = vdwg.mxu0
    %288 = vmatpush.bf16.msra.mxu0 %v240
    %289 = vmatpush.bf16.msra.mxu0 %v238
    %290 = vmatpush.bf16.msra.mxu0 %v236
    %291 = vmatpush.bf16.msra.mxu0 %v234
    %292 = vmatpush.bf16.msra.mxu0 %v232
    %293 = vmatpush.bf16.msra.mxu0 %v230
    %294 = vmatpush.bf16.msra.mxu0 %v228
    %295 = vmatpush.bf16.msra.mxu0 %v226
    %296 = vmatmul.bf16.gmra.mxu0 %v111
    %v297 = vpop.f32.mrf.mxu0
    %v298 = vadd.f32 %v284, %v297
    %v299 = vpop.f32.mrf.mxu0
    %v300 = vadd.f32 %v286, %v299
    %301 = vdwg.mxu0
    %302 = vmatpush.bf16.msra.mxu0 %v225
    %303 = vmatpush.bf16.msra.mxu0 %v223
    %304 = vmatpush.bf16.msra.mxu0 %v221
    %305 = vmatpush.bf16.msra.mxu0 %v219
    %306 = vmatpush.bf16.msra.mxu0 %v217
    %307 = vmatpush.bf16.msra.mxu0 %v215
    %308 = vmatpush.bf16.msra.mxu0 %v213
    %309 = vmatpush.bf16.msra.mxu0 %v211
    %310 = vmatmul.bf16.gmra.mxu0 %v110
    %v311 = vpop.f32.mrf.mxu0
    %v312 = vadd.f32 0.0, %v311
    %v313 = vpop.f32.mrf.mxu0
    %v314 = vadd.f32 0.0, %v313
    %315 = vdwg.mxu0
    %316 = vmatpush.bf16.msra.mxu0 %v241
    %317 = vmatpush.bf16.msra.mxu0 %v239
    %318 = vmatpush.bf16.msra.mxu0 %v237
    %319 = vmatpush.bf16.msra.mxu0 %v235
    %320 = vmatpush.bf16.msra.mxu0 %v233
    %321 = vmatpush.bf16.msra.mxu0 %v231
    %322 = vmatpush.bf16.msra.mxu0 %v229
    %323 = vmatpush.bf16.msra.mxu0 %v227
    %324 = vmatmul.bf16.gmra.mxu0 %v111
    %v325 = vpop.f32.mrf.mxu0
    %v326 = vadd.f32 %v312, %v325
    %v327 = vpop.f32.mrf.mxu0
    %v328 = vadd.f32 %v314, %v327
    %329 = vdwg.mxu0
    %v330 = vmin.f32 %v298, 30.0
    %v331 = vmin.f32 %v326, 30.0
    %v332 = vmin.f32 %v300, 30.0
    %v333 = vmin.f32 %v328, 30.0
    %v334 = vmul.f32 %v330, 1.442695
    %v335 = vpow.pop %v334
    %v336 = vmul.f32 %v331, 1.442695
    %v337 = vpow.pop %v336
    %v338 = vmul.f32 %v332, 1.442695
    %v339 = vpow.pop %v338
    %v340 = vmul.f32 %v333, 1.442695
    %v341 = vpow.pop %v340
    %v342 = vadd.f32 %v335, 1.0
    %v343 = vadd.f32 %v337, 1.0
    %v344 = vadd.f32 %v339, 1.0
    %v345 = vadd.f32 %v341, 1.0
    %v346 = vmul.f32 %v342, %v342
    %v347 = vmul.f32 %v343, %v343
    %v348 = vmul.f32 %v344, %v344
    %v349 = vmul.f32 %v345, %v345
    %v350 = vsub.f32 %v346, 1.0
    %v351 = vsub.f32 %v347, 1.0
    %v352 = vsub.f32 %v348, 1.0
    %v353 = vsub.f32 %v349, 1.0
    %v354 = vmul.f32 %v298, %v350
    %v355 = vmul.f32 %v326, %v351
    %v356 = vmul.f32 %v300, %v352
    %v357 = vmul.f32 %v328, %v353
    %v358 = vadd.f32 %v346, 1.0
    %v359 = vadd.f32 %v347, 1.0
    %v360 = vadd.f32 %v348, 1.0
    %v361 = vadd.f32 %v349, 1.0
    %v362 = vrcp.pop %v358
    %v363 = vmul.f32 %v358, %v362
    %v364 = vsub.f32 1.0, %v363
    %v365 = vmul.f32 %v362, %v364
    %v366 = vadd.f32 %v362, %v365
    %vm367 = vweird.f32 %v358
    %vm368 = vweird.f32 %v362
    %vm369 = vmor %vm367, %vm368
    %v370 = vsel %vm369, %v362, %v366
    %v371 = vand.u32 2147483647, %v358
    %vm372 = vcmp.eq.f32.partialorder %v371, 8.507059e+37
    %v373 = vand.u32 %v358, 2147483648
    %v374 = vor.u32 1.1754944e-38, %v373
    %v375 = vsel %vm372, %v374, %v370
    %v376 = vrcp.pop %v359
    %v377 = vmul.f32 %v359, %v376
    %v378 = vsub.f32 1.0, %v377
    %v379 = vmul.f32 %v376, %v378
    %v380 = vadd.f32 %v376, %v379
    %vm381 = vweird.f32 %v359
    %vm382 = vweird.f32 %v376
    %vm383 = vmor %vm381, %vm382
    %v384 = vsel %vm383, %v376, %v380
    %v385 = vand.u32 2147483647, %v359
    %vm386 = vcmp.eq.f32.partialorder %v385, 8.507059e+37
    %v387 = vand.u32 %v359, 2147483648
    %v388 = vor.u32 1.1754944e-38, %v387
    %v389 = vsel %vm386, %v388, %v384
    %v390 = vrcp.pop %v360
    %v391 = vmul.f32 %v360, %v390
    %v392 = vsub.f32 1.0, %v391
    %v393 = vmul.f32 %v390, %v392
    %v394 = vadd.f32 %v390, %v393
    %vm395 = vweird.f32 %v360
    %vm396 = vweird.f32 %v390
    %vm397 = vmor %vm395, %vm396
    %v398 = vsel %vm397, %v390, %v394
    %v399 = vand.u32 2147483647, %v360
    %vm400 = vcmp.eq.f32.partialorder %v399, 8.507059e+37
    %v401 = vand.u32 %v360, 2147483648
    %v402 = vor.u32 1.1754944e-38, %v401
    %v403 = vsel %vm400, %v402, %v398
    %v404 = vrcp.pop %v361
    %v405 = vmul.f32 %v361, %v404
    %v406 = vsub.f32 1.0, %v405
    %v407 = vmul.f32 %v404, %v406
    %v408 = vadd.f32 %v404, %v407
    %vm409 = vweird.f32 %v361
    %vm410 = vweird.f32 %v404
    %vm411 = vmor %vm409, %vm410
    %v412 = vsel %vm411, %v404, %v408
    %v413 = vand.u32 2147483647, %v361
    %vm414 = vcmp.eq.f32.partialorder %v413, 8.507059e+37
    %v415 = vand.u32 %v361, 2147483648
    %v416 = vor.u32 1.1754944e-38, %v415
    %v417 = vsel %vm414, %v416, %v412
    %v418 = vmul.f32 %v354, %v375
    %v419 = vmul.f32 %v355, %v389
    %v420 = vmul.f32 %v356, %v403
    %v421 = vmul.f32 %v357, %v417
    %v422 = vpack.c.bf16 %v420, %v418
    %v423 = vpack.c.bf16 %v421, %v419
    %v424 = vld [vmem:[#allocation4] sm:$0xff]
    %v425 = vld [vmem:[#allocation4 + $0x8] sm:$0xff]
    %v426 = vld [vmem:[#allocation4 + $0x10] sm:$0xff]
    %v427 = vld [vmem:[#allocation4 + $0x18] sm:$0xff]
    %v428 = vld [vmem:[#allocation4 + $0x20] sm:$0xff]
    %v429 = vld [vmem:[#allocation4 + $0x28] sm:$0xff]
    %v430 = vld [vmem:[#allocation4 + $0x30] sm:$0xff]
    %v431 = vld [vmem:[#allocation4 + $0x38] sm:$0xff]
    %v432 = vld [vmem:[#allocation4 + $0x40] sm:$0xff]
    %v433 = vld [vmem:[#allocation4 + $0x48] sm:$0xff]
    %v434 = vld [vmem:[#allocation4 + $0x50] sm:$0xff]
    %v435 = vld [vmem:[#allocation4 + $0x58] sm:$0xff]
    %v436 = vld [vmem:[#allocation4 + $0x60] sm:$0xff]
    %v437 = vld [vmem:[#allocation4 + $0x68] sm:$0xff]
    %v438 = vld [vmem:[#allocation4 + $0x70] sm:$0xff]
    %v439 = vld [vmem:[#allocation4 + $0x78] sm:$0xff]
    %v440 = vld [vmem:[#allocation4 + $0x80] sm:$0xff]
    %v441 = vld [vmem:[#allocation4 + $0x88] sm:$0xff]
    %v442 = vld [vmem:[#allocation4 + $0x90] sm:$0xff]
    %v443 = vld [vmem:[#allocation4 + $0x98] sm:$0xff]
    %v444 = vld [vmem:[#allocation4 + $0xa0] sm:$0xff]
    %v445 = vld [vmem:[#allocation4 + $0xa8] sm:$0xff]
    %v446 = vld [vmem:[#allocation4 + $0xb0] sm:$0xff]
    %v447 = vld [vmem:[#allocation4 + $0xb8] sm:$0xff]
    %v448 = vld [vmem:[#allocation4 + $0xc0] sm:$0xff]
    %v449 = vld [vmem:[#allocation4 + $0xc8] sm:$0xff]
    %v450 = vld [vmem:[#allocation4 + $0xd0] sm:$0xff]
    %v451 = vld [vmem:[#allocation4 + $0xd8] sm:$0xff]
    %v452 = vld [vmem:[#allocation4 + $0xe0] sm:$0xff]
    %v453 = vld [vmem:[#allocation4 + $0xe8] sm:$0xff]
    %v454 = vld [vmem:[#allocation4 + $0xf0] sm:$0xff]
    %v455 = vld [vmem:[#allocation4 + $0xf8] sm:$0xff]
    %v456 = vld [vmem:[%s3] sm:$0x3]
    %v458 = vperm.slane %v456, 0
    %v459 = vperm.slane %v456, 1
    %v494 = vunpack.c.l.b16 %v424
    %v495 = vunpack.c.h.b16 %v424
    %v496 = vunpack.c.l.b16 %v425
    %v497 = vunpack.c.h.b16 %v425
    %v498 = vunpack.c.l.b16 %v426
    %v499 = vunpack.c.h.b16 %v426
    %v500 = vunpack.c.l.b16 %v427
    %v501 = vunpack.c.h.b16 %v427
    %v502 = vunpack.c.l.b16 %v428
    %v503 = vunpack.c.h.b16 %v428
    %v504 = vunpack.c.l.b16 %v429
    %v505 = vunpack.c.h.b16 %v429
    %v506 = vunpack.c.l.b16 %v430
    %v507 = vunpack.c.h.b16 %v430
    %v508 = vunpack.c.l.b16 %v431
    %v509 = vunpack.c.h.b16 %v431
    %v510 = vunpack.c.l.b16 %v432
    %v511 = vunpack.c.h.b16 %v432
    %v512 = vunpack.c.l.b16 %v433
    %v513 = vunpack.c.h.b16 %v433
    %v514 = vunpack.c.l.b16 %v434
    %v515 = vunpack.c.h.b16 %v434
    %v516 = vunpack.c.l.b16 %v435
    %v517 = vunpack.c.h.b16 %v435
    %v518 = vunpack.c.l.b16 %v436
    %v519 = vunpack.c.h.b16 %v436
    %v520 = vunpack.c.l.b16 %v437
    %v521 = vunpack.c.h.b16 %v437
    %v522 = vunpack.c.l.b16 %v438
    %v523 = vunpack.c.h.b16 %v438
    %v524 = vunpack.c.l.b16 %v439
    %v525 = vunpack.c.h.b16 %v439
    %v526 = vunpack.c.l.b16 %v440
    %v527 = vunpack.c.h.b16 %v440
    %v528 = vunpack.c.l.b16 %v441
    %v529 = vunpack.c.h.b16 %v441
    %v530 = vunpack.c.l.b16 %v442
    %v531 = vunpack.c.h.b16 %v442
    %v532 = vunpack.c.l.b16 %v443
    %v533 = vunpack.c.h.b16 %v443
    %v534 = vunpack.c.l.b16 %v444
    %v535 = vunpack.c.h.b16 %v444
    %v536 = vunpack.c.l.b16 %v445
    %v537 = vunpack.c.h.b16 %v445
    %v538 = vunpack.c.l.b16 %v446
    %v539 = vunpack.c.h.b16 %v446
    %v540 = vunpack.c.l.b16 %v447
    %v541 = vunpack.c.h.b16 %v447
    %v542 = vunpack.c.l.b16 %v448
    %v543 = vunpack.c.h.b16 %v448
    %v544 = vunpack.c.l.b16 %v449
    %v545 = vunpack.c.h.b16 %v449
    %v546 = vunpack.c.l.b16 %v450
    %v547 = vunpack.c.h.b16 %v450
    %v548 = vunpack.c.l.b16 %v451
    %v549 = vunpack.c.h.b16 %v451
    %v550 = vunpack.c.l.b16 %v452
    %v551 = vunpack.c.h.b16 %v452
    %v552 = vunpack.c.l.b16 %v453
    %v553 = vunpack.c.h.b16 %v453
    %v554 = vunpack.c.l.b16 %v454
    %v555 = vunpack.c.h.b16 %v454
    %v556 = vunpack.c.l.b16 %v455
    %v557 = vunpack.c.h.b16 %v455
    %v558 = vpack.c.b16 %v496, %v494
    %v559 = vpack.c.b16 %v497, %v495
    %v560 = vpack.c.b16 %v500, %v498
    %v561 = vpack.c.b16 %v501, %v499
    %v562 = vpack.c.b16 %v504, %v502
    %v563 = vpack.c.b16 %v505, %v503
    %v564 = vpack.c.b16 %v508, %v506
    %v565 = vpack.c.b16 %v509, %v507
    %v566 = vpack.c.b16 %v512, %v510
    %v567 = vpack.c.b16 %v513, %v511
    %v568 = vpack.c.b16 %v516, %v514
    %v569 = vpack.c.b16 %v517, %v515
    %v570 = vpack.c.b16 %v520, %v518
    %v571 = vpack.c.b16 %v521, %v519
    %v572 = vpack.c.b16 %v524, %v522
    %v573 = vpack.c.b16 %v525, %v523
    %v574 = vpack.c.b16 %v528, %v526
    %v575 = vpack.c.b16 %v529, %v527
    %v576 = vpack.c.b16 %v532, %v530
    %v577 = vpack.c.b16 %v533, %v531
    %v578 = vpack.c.b16 %v536, %v534
    %v579 = vpack.c.b16 %v537, %v535
    %v580 = vpack.c.b16 %v540, %v538
    %v581 = vpack.c.b16 %v541, %v539
    %v582 = vpack.c.b16 %v544, %v542
    %v583 = vpack.c.b16 %v545, %v543
    %v584 = vpack.c.b16 %v548, %v546
    %v585 = vpack.c.b16 %v549, %v547
    %v586 = vpack.c.b16 %v552, %v550
    %v587 = vpack.c.b16 %v553, %v551
    %v588 = vpack.c.b16 %v556, %v554
    %v589 = vpack.c.b16 %v557, %v555
    %622 = vmatpush.bf16.msra.mxu0 %v572
    %623 = vmatpush.bf16.msra.mxu0 %v570
    %624 = vmatpush.bf16.msra.mxu0 %v568
    %625 = vmatpush.bf16.msra.mxu0 %v566
    %626 = vmatpush.bf16.msra.mxu0 %v564
    %627 = vmatpush.bf16.msra.mxu0 %v562
    %628 = vmatpush.bf16.msra.mxu0 %v560
    %629 = vmatpush.bf16.msra.mxu0 %v558
    %630 = vmatmul.bf16.gmra.mxu0 %v422
    %v631 = vpop.f32.mrf.mxu0
    %v632 = vadd.f32 %v458, %v631
    %v633 = vpop.f32.mrf.mxu0
    %v634 = vadd.f32 %v458, %v633
    %635 = vdwg.mxu0
    %636 = vmatpush.bf16.msra.mxu0 %v588
    %637 = vmatpush.bf16.msra.mxu0 %v586
    %638 = vmatpush.bf16.msra.mxu0 %v584
    %639 = vmatpush.bf16.msra.mxu0 %v582
    %640 = vmatpush.bf16.msra.mxu0 %v580
    %641 = vmatpush.bf16.msra.mxu0 %v578
    %642 = vmatpush.bf16.msra.mxu0 %v576
    %643 = vmatpush.bf16.msra.mxu0 %v574
    %644 = vmatmul.bf16.gmra.mxu0 %v423
    %v645 = vpop.f32.mrf.mxu0
    %v646 = vadd.f32 %v632, %v645
    %v647 = vpop.f32.mrf.mxu0
    %v648 = vadd.f32 %v634, %v647
    %649 = vdwg.mxu0
    %650 = vmatpush.bf16.msra.mxu0 %v573
    %651 = vmatpush.bf16.msra.mxu0 %v571
    %652 = vmatpush.bf16.msra.mxu0 %v569
    %653 = vmatpush.bf16.msra.mxu0 %v567
    %654 = vmatpush.bf16.msra.mxu0 %v565
    %655 = vmatpush.bf16.msra.mxu0 %v563
    %656 = vmatpush.bf16.msra.mxu0 %v561
    %657 = vmatpush.bf16.msra.mxu0 %v559
    %658 = vmatmul.bf16.gmra.mxu0 %v422
    %v659 = vpop.f32.mrf.mxu0
    %v660 = vadd.f32 %v459, %v659
    %v661 = vpop.f32.mrf.mxu0
    %v662 = vadd.f32 %v459, %v661
    %663 = vdwg.mxu0
    %664 = vmatpush.bf16.msra.mxu0 %v589
    %665 = vmatpush.bf16.msra.mxu0 %v587
    %666 = vmatpush.bf16.msra.mxu0 %v585
    %667 = vmatpush.bf16.msra.mxu0 %v583
    %668 = vmatpush.bf16.msra.mxu0 %v581
    %669 = vmatpush.bf16.msra.mxu0 %v579
    %670 = vmatpush.bf16.msra.mxu0 %v577
    %671 = vmatpush.bf16.msra.mxu0 %v575
    %672 = vmatmul.bf16.gmra.mxu0 %v423
    %v673 = vpop.f32.mrf.mxu0
    %v674 = vadd.f32 %v660, %v673
    %v675 = vpop.f32.mrf.mxu0
    %v676 = vadd.f32 %v662, %v675
    %677 = vdwg.mxu0
    %v678 = vmin.f32 %v646, 30.0
    %v679 = vmin.f32 %v674, 30.0
    %v680 = vmin.f32 %v648, 30.0
    %v681 = vmin.f32 %v676, 30.0
    %v682 = vmul.f32 %v678, 1.442695
    %v683 = vpow.pop %v682
    %v684 = vmul.f32 %v679, 1.442695
    %v685 = vpow.pop %v684
    %v686 = vmul.f32 %v680, 1.442695
    %v687 = vpow.pop %v686
    %v688 = vmul.f32 %v681, 1.442695
    %v689 = vpow.pop %v688
    %v690 = vadd.f32 %v683, 1.0
    %v691 = vadd.f32 %v685, 1.0
    %v692 = vadd.f32 %v687, 1.0
    %v693 = vadd.f32 %v689, 1.0
    %v694 = vmul.f32 %v690, %v690
    %v695 = vmul.f32 %v691, %v691
    %v696 = vmul.f32 %v692, %v692
    %v697 = vmul.f32 %v693, %v693
    %v698 = vsub.f32 %v694, 1.0
    %v699 = vsub.f32 %v695, 1.0
    %v700 = vsub.f32 %v696, 1.0
    %v701 = vsub.f32 %v697, 1.0
    %v702 = vmul.f32 %v646, %v698
    %v703 = vmul.f32 %v674, %v699
    %v704 = vmul.f32 %v648, %v700
    %v705 = vmul.f32 %v676, %v701
    %v706 = vadd.f32 %v694, 1.0
    %v707 = vadd.f32 %v695, 1.0
    %v708 = vadd.f32 %v696, 1.0
    %v709 = vadd.f32 %v697, 1.0
    %v710 = vrcp.pop %v706
    %v711 = vmul.f32 %v706, %v710
    %v712 = vsub.f32 1.0, %v711
    %v713 = vmul.f32 %v710, %v712
    %v714 = vadd.f32 %v710, %v713
    %vm715 = vweird.f32 %v706
    %vm716 = vweird.f32 %v710
    %vm717 = vmor %vm715, %vm716
    %v718 = vsel %vm717, %v710, %v714
    %v719 = vand.u32 2147483647, %v706
    %vm720 = vcmp.eq.f32.partialorder %v719, 8.507059e+37
    %v721 = vand.u32 %v706, 2147483648
    %v722 = vor.u32 1.1754944e-38, %v721
    %v723 = vsel %vm720, %v722, %v718
    %v724 = vrcp.pop %v707
    %v725 = vmul.f32 %v707, %v724
    %v726 = vsub.f32 1.0, %v725
    %v727 = vmul.f32 %v724, %v726
    %v728 = vadd.f32 %v724, %v727
    %vm729 = vweird.f32 %v707
    %vm730 = vweird.f32 %v724
    %vm731 = vmor %vm729, %vm730
    %v732 = vsel %vm731, %v724, %v728
    %v733 = vand.u32 2147483647, %v707
    %vm734 = vcmp.eq.f32.partialorder %v733, 8.507059e+37
    %v735 = vand.u32 %v707, 2147483648
    %v736 = vor.u32 1.1754944e-38, %v735
    %v737 = vsel %vm734, %v736, %v732
    %v738 = vrcp.pop %v708
    %v739 = vmul.f32 %v708, %v738
    %v740 = vsub.f32 1.0, %v739
    %v741 = vmul.f32 %v738, %v740
    %v742 = vadd.f32 %v738, %v741
    %vm743 = vweird.f32 %v708
    %vm744 = vweird.f32 %v738
    %vm745 = vmor %vm743, %vm744
    %v746 = vsel %vm745, %v738, %v742
    %v747 = vand.u32 2147483647, %v708
    %vm748 = vcmp.eq.f32.partialorder %v747, 8.507059e+37
    %v749 = vand.u32 %v708, 2147483648
    %v750 = vor.u32 1.1754944e-38, %v749
    %v751 = vsel %vm748, %v750, %v746
    %v752 = vrcp.pop %v709
    %v753 = vmul.f32 %v709, %v752
    %v754 = vsub.f32 1.0, %v753
    %v755 = vmul.f32 %v752, %v754
    %v756 = vadd.f32 %v752, %v755
    %vm757 = vweird.f32 %v709
    %vm758 = vweird.f32 %v752
    %vm759 = vmor %vm757, %vm758
    %v760 = vsel %vm759, %v752, %v756
    %v761 = vand.u32 2147483647, %v709
    %vm762 = vcmp.eq.f32.partialorder %v761, 8.507059e+37
    %v763 = vand.u32 %v709, 2147483648
    %v764 = vor.u32 1.1754944e-38, %v763
    %v765 = vsel %vm762, %v764, %v760
    %v766 = vmul.f32 %v702, %v723
    %v767 = vmul.f32 %v703, %v737
    %v768 = vmul.f32 %v704, %v751
    %v769 = vmul.f32 %v705, %v765
    %v770 = vpack.c.bf16 %v768, %v766
    %v771 = vpack.c.bf16 %v769, %v767
    %v772 = vld [vmem:[#allocation6] sm:$0xf]
    %v773 = vld [vmem:[#allocation6 + $0x4] sm:$0xf]
    %v774 = vld [vmem:[#allocation6 + $0x8] sm:$0xf]
    %v775 = vld [vmem:[#allocation6 + $0xc] sm:$0xf]
    %v776 = vld [vmem:[#allocation6 + $0x10] sm:$0xf]
    %v777 = vld [vmem:[#allocation6 + $0x14] sm:$0xf]
    %v778 = vld [vmem:[#allocation6 + $0x18] sm:$0xf]
    %v779 = vld [vmem:[#allocation6 + $0x1c] sm:$0xf]
    %v780 = vld [vmem:[#allocation6 + $0x20] sm:$0xf]
    %v781 = vld [vmem:[#allocation6 + $0x24] sm:$0xf]
    %v782 = vld [vmem:[#allocation6 + $0x28] sm:$0xf]
    %v783 = vld [vmem:[#allocation6 + $0x2c] sm:$0xf]
    %v784 = vld [vmem:[#allocation6 + $0x30] sm:$0xf]
    %v785 = vld [vmem:[#allocation6 + $0x34] sm:$0xf]
    %v786 = vld [vmem:[#allocation6 + $0x38] sm:$0xf]
    %v787 = vld [vmem:[#allocation6 + $0x3c] sm:$0xf]
    %v788 = vld [vmem:[#allocation6 + $0x40] sm:$0xf]
    %v789 = vld [vmem:[#allocation6 + $0x44] sm:$0xf]
    %v790 = vld [vmem:[#allocation6 + $0x48] sm:$0xf]
    %v791 = vld [vmem:[#allocation6 + $0x4c] sm:$0xf]
    %v792 = vld [vmem:[#allocation6 + $0x50] sm:$0xf]
    %v793 = vld [vmem:[#allocation6 + $0x54] sm:$0xf]
    %v794 = vld [vmem:[#allocation6 + $0x58] sm:$0xf]
    %v795 = vld [vmem:[#allocation6 + $0x5c] sm:$0xf]
    %v796 = vld [vmem:[#allocation6 + $0x60] sm:$0xf]
    %v797 = vld [vmem:[#allocation6 + $0x64] sm:$0xf]
    %v798 = vld [vmem:[#allocation6 + $0x68] sm:$0xf]
    %v799 = vld [vmem:[#allocation6 + $0x6c] sm:$0xf]
    %v800 = vld [vmem:[#allocation6 + $0x70] sm:$0xf]
    %v801 = vld [vmem:[#allocation6 + $0x74] sm:$0xf]
    %v802 = vld [vmem:[#allocation6 + $0x78] sm:$0xf]
    %v803 = vld [vmem:[#allocation6 + $0x7c] sm:$0xf]
    %v804 = vld [vmem:[%s5] sm:$0x1]
    %v806 = vperm.slane %v804, 0
    %v840 = vunpack.c.l.b16 %v772
    %v841 = vunpack.c.l.b16 %v773
    %v842 = vunpack.c.l.b16 %v774
    %v843 = vunpack.c.l.b16 %v775
    %v844 = vunpack.c.l.b16 %v776
    %v845 = vunpack.c.l.b16 %v777
    %v846 = vunpack.c.l.b16 %v778
    %v847 = vunpack.c.l.b16 %v779
    %v848 = vunpack.c.l.b16 %v780
    %v849 = vunpack.c.l.b16 %v781
    %v850 = vunpack.c.l.b16 %v782
    %v851 = vunpack.c.l.b16 %v783
    %v852 = vunpack.c.l.b16 %v784
    %v853 = vunpack.c.l.b16 %v785
    %v854 = vunpack.c.l.b16 %v786
    %v855 = vunpack.c.l.b16 %v787
    %v856 = vunpack.c.l.b16 %v788
    %v857 = vunpack.c.l.b16 %v789
    %v858 = vunpack.c.l.b16 %v790
    %v859 = vunpack.c.l.b16 %v791
    %v860 = vunpack.c.l.b16 %v792
    %v861 = vunpack.c.l.b16 %v793
    %v862 = vunpack.c.l.b16 %v794
    %v863 = vunpack.c.l.b16 %v795
    %v864 = vunpack.c.l.b16 %v796
    %v865 = vunpack.c.l.b16 %v797
    %v866 = vunpack.c.l.b16 %v798
    %v867 = vunpack.c.l.b16 %v799
    %v868 = vunpack.c.l.b16 %v800
    %v869 = vunpack.c.l.b16 %v801
    %v870 = vunpack.c.l.b16 %v802
    %v871 = vunpack.c.l.b16 %v803
    %v872 = vpack.c.b16 %v841, %v840
    %v873 = vpack.c.b16 %v843, %v842
    %v874 = vpack.c.b16 %v845, %v844
    %v875 = vpack.c.b16 %v847, %v846
    %v876 = vpack.c.b16 %v849, %v848
    %v877 = vpack.c.b16 %v851, %v850
    %v878 = vpack.c.b16 %v853, %v852
    %v879 = vpack.c.b16 %v855, %v854
    %v880 = vpack.c.b16 %v857, %v856
    %v881 = vpack.c.b16 %v859, %v858
    %v882 = vpack.c.b16 %v861, %v860
    %v883 = vpack.c.b16 %v863, %v862
    %v884 = vpack.c.b16 %v865, %v864
    %v885 = vpack.c.b16 %v867, %v866
    %v886 = vpack.c.b16 %v869, %v868
    %v887 = vpack.c.b16 %v871, %v870
    %904 = vmatpush.bf16.msra.mxu0 %v879
    %905 = vmatpush.bf16.msra.mxu0 %v878
    %906 = vmatpush.bf16.msra.mxu0 %v877
    %907 = vmatpush.bf16.msra.mxu0 %v876
    %908 = vmatpush.bf16.msra.mxu0 %v875
    %909 = vmatpush.bf16.msra.mxu0 %v874
    %910 = vmatpush.bf16.msra.mxu0 %v873
    %911 = vmatpush.bf16.msra.mxu0 %v872
    %912 = vmatmul.bf16.gmra.mxu0 %v770
    %v913 = vpop.f32.mrf.mxu0
    %v914 = vadd.f32 %v806, %v913
    %v915 = vpop.f32.mrf.mxu0
    %v916 = vadd.f32 %v806, %v915
    %917 = vdwg.mxu0
    %918 = vmatpush.bf16.msra.mxu0 %v887
    %919 = vmatpush.bf16.msra.mxu0 %v886
    %920 = vmatpush.bf16.msra.mxu0 %v885
    %921 = vmatpush.bf16.msra.mxu0 %v884
    %922 = vmatpush.bf16.msra.mxu0 %v883
    %923 = vmatpush.bf16.msra.mxu0 %v882
    %924 = vmatpush.bf16.msra.mxu0 %v881
    %925 = vmatpush.bf16.msra.mxu0 %v880
    %926 = vmatmul.bf16.gmra.mxu0 %v771
    %v927 = vpop.f32.mrf.mxu0
    %v928 = vadd.f32 %v914, %v927
    %v929 = vpop.f32.mrf.mxu0
    %v930 = vadd.f32 %v916, %v929
    %931 = vdwg.mxu0
    %932 = vst [vmem:[%s6] sm:$0xff] %v928
    %933 = vst [vmem:[%s6 + $0x8] sm:$0xff] %v930
    // Predicated region
    $region38: #{efficient_diffusion_policy_forward.1} parent=1 // pred_check
      _
    $region39: #{efficient_diffusion_policy_forward.1} parent=1 // pred_check_branch
      %935 = sbr.rel (0) target = $region41
    $region40: #{efficient_diffusion_policy_forward.1} parent=1 // pred_region
      _
    $region41: #{efficient_diffusion_policy_forward.1} parent=1 // pred_fallthru
      _
    // Predicated region
    $region42: #{efficient_diffusion_policy_forward.1} parent=1 // pred_check
      _
    $region43: #{efficient_diffusion_policy_forward.1} parent=1 // pred_check_branch
      %937 = sbr.rel (0) target = $region45
    $region44: #{efficient_diffusion_policy_forward.1} parent=1 // pred_region
      _
    $region45: #{efficient_diffusion_policy_forward.1} parent=1 // pred_fallthru
      _
    %938 = vsyncpa [#allocation3], 1
    %939 = vsyncpa [#allocation5], 1

</llo_original>
